<compile_context>
chip_gen: v7x
topology: tpu7x:2x2x1
jax: 0.10.0
libtpu: 0.0.40
codegen_flags: <defaults>
</compile_context>

<pallas_src>
import functools

import jax
import jax.numpy as jnp
from jax.experimental import pallas as pl
from jax.experimental.pallas import tpu as pltpu


def _lbub_kernel(lb_ref, rng_ref, zeta_ref, res_ref, part_ref, *, total_rows, tile_rows):
    """Bounded transform + per-tile partial constraint sum.

    lb_ref, rng_ref : SMEM (1,) scalars  (lower_bound, upper_bound - lower_bound)
    zeta_ref        : VMEM (tile_rows, C) input tile
    res_ref         : VMEM (tile_rows, C) output tile
    part_ref        : VMEM (1, 1) per-tile partial constraint sum
    """
    z = zeta_ref[...]

    # Shared-exp, numerically stable sigmoid / log-sigmoid.
    #   e = exp(-|z|)  never overflows and is reused for both quantities.
    e = jnp.exp(-jnp.abs(z))
    denom = 1.0 + e
    sig = jnp.where(z >= 0, 1.0, e) / denom

    # res = lower_bound + range * sigmoid(zeta)
    res_ref[...] = lb_ref[0] + rng_ref[0] * sig

    # log(sigmoid(z)) = min(z, 0) - log1p(e)   (stable: no log(0) underflow)
    log_sig = jnp.minimum(z, 0.0) - jnp.log1p(e)
    jac = 2.0 * log_sig - z

    # Mask padded rows of a ragged last tile so they don't pollute the sum.
    i = pl.program_id(0)
    row_ids = jax.lax.broadcasted_iota(jnp.int32, z.shape, 0)
    valid = row_ids < (total_rows - i * tile_rows)
    jac = jnp.where(valid, jac, 0.0)

    part_ref[...] = jnp.sum(jac, keepdims=True)


def lower_upper_bound_forward(zeta, lower_bound, upper_bound):
    """Pallas equivalent of LowerUpperBoundImpl.forward().

    Returns (res, constraint_contrib_scalar).
    """
    R, C = zeta.shape
    dtype = zeta.dtype
    itemsize = jnp.dtype(dtype).itemsize

    # Biggest row tile such that 2 tiled operands x 2 pipeline buffers stay
    # well under the default scoped-VMEM limit on all generations.
    vmem_budget = 8 * 1024 * 1024  # bytes, conservative across v5e/v6e/v7x
    max_rows = (vmem_budget // (4 * C * itemsize)) // 8 * 8
    max_rows = max(max_rows, 8)

    if R <= max_rows:
        tile_r = R            # whole array as one block -> grid = (1,)
    else:
        tile_r = max_rows     # multiple of 8; ragged last tile is masked
    num_tiles = pl.cdiv(R, tile_r)

    lb = jnp.asarray([lower_bound], dtype=dtype)
    rng = jnp.asarray([upper_bound - lower_bound], dtype=dtype)

    kernel = functools.partial(_lbub_kernel, total_rows=R, tile_rows=tile_r)

    res, partials = pl.pallas_call(
        kernel,
        out_shape=(
            jax.ShapeDtypeStruct((R, C), dtype),
            jax.ShapeDtypeStruct((num_tiles, 1), jnp.float32),
        ),
        grid_spec=pltpu.PrefetchScalarGridSpec(
            num_scalar_prefetch=0,
            grid=(num_tiles,),
            in_specs=[
                pl.BlockSpec(memory_space=pltpu.MemorySpace.SMEM),  # lower_bound
                pl.BlockSpec(memory_space=pltpu.MemorySpace.SMEM),  # range
                pl.BlockSpec((tile_r, C), lambda i: (i, 0)),        # zeta tile
            ],
            out_specs=(
                pl.BlockSpec((tile_r, C), lambda i: (i, 0)),        # res tile
                pl.BlockSpec((1, 1), lambda i: (i, 0)),             # partial sum
            ),
        ),
        compiler_params=pltpu.CompilerParams(
            # No resident accumulator -> independent grid steps -> megacore-friendly.
            dimension_semantics=("parallel",),
        ),
    )(lb, rng, zeta)

    # Final cross-tile reduction of the constraint contribution.
    return res, jnp.sum(partials)


if __name__ == "__main__":
    key = jax.random.PRNGKey(0)

    # size = (32, 128): the UnconstrainedImpl backing parameter `zeta`
    size = (32, 128)
    zeta = jax.random.normal(key, size, dtype=jnp.float32)

    lower_bound = -1.5
    upper_bound = 2.5

    res, constraint = lower_upper_bound_forward(zeta, lower_bound, upper_bound)
    jax.block_until_ready((res, constraint))

    # Pure-JAX reference check
    sig_ref = jax.nn.sigmoid(zeta)
    res_ref = lower_bound + (upper_bound - lower_bound) * sig_ref
    constraint_ref = jnp.sum(2.0 * jnp.log(sig_ref) - zeta)

    assert jnp.allclose(res, res_ref, atol=1e-5, rtol=1e-5)
    assert jnp.allclose(constraint, constraint_ref, atol=1e-2, rtol=1e-5)

    print("KERNEL_OK")
</pallas_src>

<mosaic_0001>
module attributes {stable_mosaic.version = 11 : i64} {
  func.func @_lbub_kernel(%arg0: i32, %arg1: memref<1xf32, #tpu.memory_space<smem>>, %arg2: memref<1xf32, #tpu.memory_space<smem>>, %arg3: memref<32x128xf32, #tpu.memory_space<vmem>>, %arg4: memref<32x128xf32, #tpu.memory_space<vmem>>, %arg5: memref<1x1xf32, #tpu.memory_space<vmem>>) attributes {dimension_semantics = [#tpu.dimension_semantics<parallel>], iteration_bounds = array<i64: 1>, scalar_prefetch = 0 : i64, scratch_operands = 0 : i64, tpu.core_type = #tpu.core_type<tc>, window_params = [{transform_indices = @transform_0, window_bounds = array<i64: 1>}, {transform_indices = @transform_1, window_bounds = array<i64: 1>}, {transform_indices = @transform_2, window_bounds = array<i64: 32, 128>}, {transform_indices = @transform_3, window_bounds = array<i64: 32, 128>}, {transform_indices = @transform_4, window_bounds = array<i64: 1, 1>}]} {
    %c0 = arith.constant 0 : index
    %c0_0 = arith.constant 0 : index
    %0 = vector.load %arg3[%c0, %c0_0] : memref<32x128xf32, #tpu.memory_space<vmem>>, vector<32x128xf32>
    %1 = math.absf %0 : vector<32x128xf32>
    %cst = arith.constant 0.000000e+00 : f32
    %2 = vector.broadcast %cst : f32 to vector<32x128xf32>
    %3 = arith.subf %2, %1 : vector<32x128xf32>
    %4 = math.exp %3 : vector<32x128xf32>
    %cst_1 = arith.constant 1.000000e+00 : f32
    %5 = vector.broadcast %cst_1 : f32 to vector<32x128xf32>
    %6 = arith.addf %5, %4 : vector<32x128xf32>
    %cst_2 = arith.constant 0.000000e+00 : f32
    %7 = vector.broadcast %cst_2 : f32 to vector<32x128xf32>
    %8 = arith.cmpf oge, %0, %7 : vector<32x128xf32>
    %cst_3 = arith.constant 1.000000e+00 : f32
    %9 = vector.broadcast %cst_3 : f32 to vector<32x128xf32>
    %10 = arith.select %8, %9, %4 : vector<32x128xi1>, vector<32x128xf32>
    %11 = arith.divf %10, %6 : vector<32x128xf32>
    %c0_4 = arith.constant 0 : index
    %12 = memref.load %arg1[%c0_4] : memref<1xf32, #tpu.memory_space<smem>>
    %c0_5 = arith.constant 0 : index
    %13 = memref.load %arg2[%c0_5] : memref<1xf32, #tpu.memory_space<smem>>
    %14 = vector.broadcast %13 : f32 to vector<32x128xf32>
    %15 = arith.mulf %14, %11 : vector<32x128xf32>
    %16 = vector.broadcast %12 : f32 to vector<32x128xf32>
    %17 = arith.addf %16, %15 : vector<32x128xf32>
    %c0_6 = arith.constant 0 : index
    %c0_7 = arith.constant 0 : index
    %18 = vector.load %arg4[%c0_6, %c0_7] : memref<32x128xf32, #tpu.memory_space<vmem>>, vector<32x128xf32>
    tpu.vector_store %arg4[%c0_6, %c0_7], %17 {strides = array<i32>} : memref<32x128xf32, #tpu.memory_space<vmem>>, vector<32x128xf32>,
    %cst_8 = arith.constant 0.000000e+00 : f32
    %19 = vector.broadcast %cst_8 : f32 to vector<32x128xf32>
    %20 = arith.minimumf %0, %19 : vector<32x128xf32>
    %21 = math.log1p %4 : vector<32x128xf32>
    %22 = arith.subf %20, %21 : vector<32x128xf32>
    %cst_9 = arith.constant 2.000000e+00 : f32
    %23 = vector.broadcast %cst_9 : f32 to vector<32x128xf32>
    %24 = arith.mulf %23, %22 : vector<32x128xf32>
    %25 = arith.subf %24, %0 : vector<32x128xf32>
    %26 = tpu.iota {dimensions = array<i32: 0>} : vector<32x128xi32>
    %c32_i32 = arith.constant 32 : i32
    %27 = arith.muli %arg0, %c32_i32 : i32
    %c32_i32_10 = arith.constant 32 : i32
    %28 = arith.subi %c32_i32_10, %27 : i32
    %29 = vector.broadcast %28 : i32 to vector<32x128xi32>
    %30 = arith.cmpi slt, %26, %29 : vector<32x128xi32>
    %cst_11 = arith.constant 0.000000e+00 : f32
    %31 = vector.broadcast %cst_11 : f32 to vector<32x128xf32>
    %32 = arith.select %30, %25, %31 : vector<32x128xi1>, vector<32x128xf32>
    %33 = vector.shape_cast %32 : vector<32x128xf32> to vector<1x32x128xf32>
    %cst_12 = arith.constant dense<0.000000e+00> : vector<1xf32>
    %34 = vector.multi_reduction <add>, %33, %cst_12 [1, 2] : vector<1x32x128xf32> to vector<1xf32>
    %35 = vector.shape_cast %34 : vector<1xf32> to vector<1x1x1xf32>
    %36 = vector.extract %35[0, 0, 0] : f32 from vector<1x1x1xf32>
    %37 = vector.broadcast %36 : f32 to vector<1x1xf32>
    %c0_13 = arith.constant 0 : index
    %c0_14 = arith.constant 0 : index
    %38 = vector.load %arg5[%c0_13, %c0_14] : memref<1x1xf32, #tpu.memory_space<vmem>>, vector<1x1xf32>
    tpu.vector_store %arg5[%c0_13, %c0_14], %37 {strides = array<i32>} : memref<1x1xf32, #tpu.memory_space<vmem>>, vector<1x1xf32>,
    return
  }
  func.func @transform_0(%arg0: i32) -> i32 {
    %c0_i32 = arith.constant 0 : i32
    %c0_i32_0 = arith.constant 0 : i32
    return %c0_i32 : i32
  }
  func.func @transform_1(%arg0: i32) -> i32 {
    %c0_i32 = arith.constant 0 : i32
    %c0_i32_0 = arith.constant 0 : i32
    return %c0_i32 : i32
  }
  func.func @transform_2(%arg0: i32) -> (i32, i32) {
    %c0_i32 = arith.constant 0 : i32
    %c0_i32_0 = arith.constant 0 : i32
    return %arg0, %c0_i32 : i32, i32
  }
  func.func @transform_3(%arg0: i32) -> (i32, i32) {
    %c0_i32 = arith.constant 0 : i32
    %c0_i32_0 = arith.constant 0 : i32
    return %arg0, %c0_i32 : i32, i32
  }
  func.func @transform_4(%arg0: i32) -> (i32, i32) {
    %c0_i32 = arith.constant 0 : i32
    %c0_i32_0 = arith.constant 0 : i32
    return %arg0, %c0_i32 : i32, i32
  }
}

</mosaic_0001>

<llo_original>
// kernel: tpu_custom_call.1
$region0: #{tpu_custom_call.1}
  #allocation0 [shape = 'u32[]', space=smem, size = 0x4, offset = 0x4, fixed_abs, tag = 'smem constant byte address 0x4 - core index']
  #allocation1 [shape = 'u32[144,128]{1,0:T(1,128)}', space=vmem, size = 0x12000, scoped, tag = 'internal scratch']
  #allocation2 [shape = 'f32[1]{0:T(128)S(6)}', space=smem, size = 0x200, scoped, tag = 'scoped memory for tpu_custom_call.1']
  #allocation3 [shape = 'f32[1]{0:T(128)S(6)}', space=smem, size = 0x200, scoped, tag = 'scoped memory for tpu_custom_call.1']
  %s0 = inlined_call_operand.<no memory space> [shape: f32[1], index: 0, kind: input, shape index: {}]
  %s1 = inlined_call_operand.<no memory space> [shape: f32[1], index: 1, kind: input, shape index: {}]
  %s2 = inlined_call_operand.hbm [shape: f32[32,128], index: 2, kind: input, shape index: {}]
  %s3 = inlined_call_operand.hbm [shape: f32[32,128], index: 3, kind: output, shape index: {0}]
  %s4 = inlined_call_operand.hbm [shape: f32[1,1], index: 4, kind: output, shape index: {1}]
  %5 = xla_tuple %s3, %s4
  %s6 = sld [smem:[#allocation0]]
  $region34: #{tpu_custom_call.1} parent=0
    _
  %s8 = ssub.s32 1, %s6
  %s9 = scalar_select 0, %s8, %s6
  %10 = sst [smem:[#allocation2]] %s0
  %11 = sst [smem:[#allocation3]] %s1
  $region1: #{tpu_custom_call.1} parent=0
    #allocation4 [shape = 'u8[16384]{0}', space=vmem, size = 0x4000, scoped, tag = 'input window, operand 2, single buffered']
    #allocation5 [shape = 's32[1]{0}', space=sflag, size = 0x4, scoped, tag = 'scoped memory for tpu_custom_call.1']
    #allocation6 [shape = 's32[1]{0}', space=sflag, size = 0x4, scoped, tag = 'scoped memory for tpu_custom_call.1']
    #allocation7 [shape = 'u8[16384]{0}', space=vmem, size = 0x4000, scoped, tag = 'output window, operand 0, single buffered']
    #allocation8 [shape = 'u8[512]{0}', space=vmem, size = 0x400, scoped, tag = 'output window, operand 1, single buffered']
    #allocation9 [shape = 's32[1]{0}', space=sflag, size = 0x4, scoped, tag = 'scoped memory for tpu_custom_call.1']
    %12 = vsyncpa [#allocation5], 0
    %13 = vsyncpa [#allocation6], 0
    %14 = vsyncpa [#allocation9], 0
    // Predicated region
    $region2: #{tpu_custom_call.1} parent=1 // pred_check
      _
    $region3: #{tpu_custom_call.1} parent=1 // pred_check_branch
      %16 = sbr.rel (0) target = $region5
    $region4: #{tpu_custom_call.1} parent=1 // pred_region
      _
    $region5: #{tpu_custom_call.1} parent=1 // pred_fallthru
      _
    // Predicated region
    $region6: #{tpu_custom_call.1} parent=1 // pred_check
      _
    $region7: #{tpu_custom_call.1} parent=1 // pred_check_branch
      %18 = sbr.rel (0) target = $region9
    $region8: #{tpu_custom_call.1} parent=1 // pred_region
      _
    $region9: #{tpu_custom_call.1} parent=1 // pred_fallthru
      _
    // Predicated region
    $region10: #{tpu_custom_call.1} parent=1 // pred_check
      _
    $region11: #{tpu_custom_call.1} parent=1 // pred_check_branch
      %20 = sbr.rel (0) target = $region13
    $region12: #{tpu_custom_call.1} parent=1 // pred_region
      %s22 = ssub.s32 512, 512
      %23 = vsyncadd [#allocation5], %s22
      %s24 = sshll.u32 [#allocation4], 4
      %s25 = int_to_ptr.vmem [resolvable:$true] %s24
      %30 = dma.hbm_to_vmem [thread:$0]  %s2, 512, %s25, [#allocation5], 128, 128, 8
    $region13: #{tpu_custom_call.1} parent=1 // pred_fallthru
      _
    // Predicated region
    $region14: #{tpu_custom_call.1} parent=1 // pred_check
      _
    $region15: #{tpu_custom_call.1} parent=1 // pred_check_branch
      %32 = sbr.rel (0) target = $region17
    $region16: #{tpu_custom_call.1} parent=1 // pred_region
      %33 = dma.done [#allocation5], 512
    $region17: #{tpu_custom_call.1} parent=1 // pred_fallthru
      _
    %v34 = vld [vmem:[#allocation4] sm:$0xff]
    %v35 = vld [vmem:[#allocation4 + $0x8] sm:$0xff]
    %v36 = vld [vmem:[#allocation4 + $0x10] sm:$0xff]
    %v37 = vld [vmem:[#allocation4 + $0x18] sm:$0xff]
    %v38 = vand.u32 2147483647, %v34
    %v39 = vand.u32 2147483647, %v35
    %v40 = vand.u32 2147483647, %v36
    %v41 = vand.u32 2147483647, %v37
    %v42 = vsub.f32 0.0, %v38
    %v43 = vsub.f32 0.0, %v39
    %v44 = vsub.f32 0.0, %v40
    %v45 = vsub.f32 0.0, %v41
    %v46 = vmul.f32 %v42, 1.442695
    %v47 = vpow.pop %v46
    %v48 = vmul.f32 %v43, 1.442695
    %v49 = vpow.pop %v48
    %v50 = vmul.f32 %v44, 1.442695
    %v51 = vpow.pop %v50
    %v52 = vmul.f32 %v45, 1.442695
    %v53 = vpow.pop %v52
    %v54 = vadd.f32 %v47, 1.0
    %v55 = vadd.f32 %v49, 1.0
    %v56 = vadd.f32 %v51, 1.0
    %v57 = vadd.f32 %v53, 1.0
    %vm58 = vcmp.ge.f32.partialorder %v34, 0.0
    %vm59 = vcmp.ge.f32.partialorder %v35, 0.0
    %vm60 = vcmp.ge.f32.partialorder %v36, 0.0
    %vm61 = vcmp.ge.f32.partialorder %v37, 0.0
    %v62 = vsel %vm58, 1.0, %v47
    %v63 = vsel %vm59, 1.0, %v49
    %v64 = vsel %vm60, 1.0, %v51
    %v65 = vsel %vm61, 1.0, %v53
    %v66 = vrcp.pop %v54
    %v67 = vmul.f32 %v62, %v66
    %v68 = vrcp.pop %v55
    %v69 = vmul.f32 %v63, %v68
    %v70 = vrcp.pop %v56
    %v71 = vmul.f32 %v64, %v70
    %v72 = vrcp.pop %v57
    %v73 = vmul.f32 %v65, %v72
    %s74 = sld [smem:[#allocation2]]
    %s75 = sld [smem:[#allocation3]]
    %v76 = vstv %s75
    %v77 = vmul.f32 %v76, %v67
    %v78 = vmul.f32 %v76, %v69
    %v79 = vmul.f32 %v76, %v71
    %v80 = vmul.f32 %v76, %v73
    %v81 = vstv %s74
    %v82 = vadd.f32 %v81, %v77
    %v83 = vadd.f32 %v81, %v78
    %v84 = vadd.f32 %v81, %v79
    %v85 = vadd.f32 %v81, %v80
    %86 = vst [vmem:[#allocation7] sm:$0xff] %v82
    %87 = vst [vmem:[#allocation7 + $0x8] sm:$0xff] %v83
    %88 = vst [vmem:[#allocation7 + $0x10] sm:$0xff] %v84
    %89 = vst [vmem:[#allocation7 + $0x18] sm:$0xff] %v85
    %v90 = vmin.f32 %v34, 0.0
    %v91 = vmin.f32 %v35, 0.0
    %v92 = vmin.f32 %v36, 0.0
    %v93 = vmin.f32 %v37, 0.0
    %v94 = vadd.f32 %v47, 1.0
    %v95 = vlog2.pop %v94
    %v96 = vmul.f32 %v95, 0.6931472
    %v97 = vmul.f32 -0.5, %v47
    %v98 = vadd.f32 %v97, 1.0
    %v99 = vmul.f32 %v98, %v47
    %v100 = vand.u32 2147483647, %v47
    %vm101 = vcmp.lt.f32.partialorder %v100, 0.0004427343
    %v102 = vsel %vm101, %v99, %v96
    %v103 = vadd.f32 %v49, 1.0
    %v104 = vlog2.pop %v103
    %v105 = vmul.f32 %v104, 0.6931472
    %v106 = vmul.f32 -0.5, %v49
    %v107 = vadd.f32 %v106, 1.0
    %v108 = vmul.f32 %v107, %v49
    %v109 = vand.u32 2147483647, %v49
    %vm110 = vcmp.lt.f32.partialorder %v109, 0.0004427343
    %v111 = vsel %vm110, %v108, %v105
    %v112 = vadd.f32 %v51, 1.0
    %v113 = vlog2.pop %v112
    %v114 = vmul.f32 %v113, 0.6931472
    %v115 = vmul.f32 -0.5, %v51
    %v116 = vadd.f32 %v115, 1.0
    %v117 = vmul.f32 %v116, %v51
    %v118 = vand.u32 2147483647, %v51
    %vm119 = vcmp.lt.f32.partialorder %v118, 0.0004427343
    %v120 = vsel %vm119, %v117, %v114
    %v121 = vadd.f32 %v53, 1.0
    %v122 = vlog2.pop %v121
    %v123 = vmul.f32 %v122, 0.6931472
    %v124 = vmul.f32 -0.5, %v53
    %v125 = vadd.f32 %v124, 1.0
    %v126 = vmul.f32 %v125, %v53
    %v127 = vand.u32 2147483647, %v53
    %vm128 = vcmp.lt.f32.partialorder %v127, 0.0004427343
    %v129 = vsel %vm128, %v126, %v123
    %v130 = vsub.f32 %v90, %v102
    %v131 = vsub.f32 %v91, %v111
    %v132 = vsub.f32 %v92, %v120
    %v133 = vsub.f32 %v93, %v129
    %v134 = vmul.f32 %v130, 2.0
    %v135 = vmul.f32 %v131, 2.0
    %v136 = vmul.f32 %v132, 2.0
    %v137 = vmul.f32 %v133, 2.0
    %v138 = vsub.f32 %v134, %v34
    %v139 = vsub.f32 %v135, %v35
    %v140 = vsub.f32 %v136, %v36
    %v141 = vsub.f32 %v137, %v37
    %v142 = vlaneseq
    %v143 = vshrl.u32 %v142, 7
    %v144 = vadd.s32 %v143, 8
    %v145 = vadd.s32 %v143, 16
    %v146 = vadd.s32 %v143, 24
    %s147 = smul.u32 0, 32
    %s148 = ssub.s32 32, %s147
    %v149 = vstv %s148
    %vm150 = vcmp.lt.s32.totalorder %v143, %v149
    %vm151 = vcmp.lt.s32.totalorder %v144, %v149
    %vm152 = vcmp.lt.s32.totalorder %v145, %v149
    %vm153 = vcmp.lt.s32.totalorder %v146, %v149
    %v154 = vsel %vm150, %v138, 0.0
    %v155 = vsel %vm151, %v139, 0.0
    %v156 = vsel %vm152, %v140, 0.0
    %v157 = vsel %vm153, %v141, 0.0
    %v158 = vadd.f32 %v154, %v155
    %v159 = vadd.f32 %v158, %v156
    %v160 = vadd.f32 %v159, %v157
    %161 = vadd.xlane.f32.xlu0 %v160
    %v162 = vpop.xlane.xlu0 %161
    %v163 = vrot.slane %v162, 4
    %v164 = vadd.f32 %v162, %v163
    %v165 = vrot.slane %v164, 2
    %v166 = vadd.f32 %v164, %v165
    %v167 = vrot.slane %v166, 1
    %v168 = vadd.f32 %v166, %v167
    %s169 = vtos %v168
    %v170 = vstv %s169
    %vm171 = vcmask 0
    %172 = vst.msk [vmem:[#allocation8] sm:$0x1] %vm171, %v170
    // Predicated region
    $region18: #{tpu_custom_call.1} parent=1 // pred_check
      _
    $region19: #{tpu_custom_call.1} parent=1 // pred_check_branch
      %174 = sbr.rel (0) target = $region21
    $region20: #{tpu_custom_call.1} parent=1 // pred_region
      %s176 = ssub.s32 512, 512
      %177 = vsyncadd [#allocation6], %s176
      %s178 = sshll.u32 [#allocation7], 4
      %s179 = int_to_ptr.vmem [resolvable:$true] %s178
      %184 = dma.vmem_to_hbm [thread:$0]  %s179, 512, %s3, [#allocation6], 128, 128, 8
    $region21: #{tpu_custom_call.1} parent=1 // pred_fallthru
      _
    // Predicated region
    $region22: #{tpu_custom_call.1} parent=1 // pred_check
      _
    $region23: #{tpu_custom_call.1} parent=1 // pred_check_branch
      %186 = sbr.rel (0) target = $region25
    $region24: #{tpu_custom_call.1} parent=1 // pred_region
      %s188 = ssub.s32 16, 16
      %189 = vsyncadd [#allocation9], %s188
      %s191 = sshll.u32 [#allocation8], 4
      %s192 = int_to_ptr.vmem [resolvable:$true] %s191
      %194 = dma.vmem_to_hbm [thread:$0]  %s192, 16, %s4, [#allocation9]
    $region25: #{tpu_custom_call.1} parent=1 // pred_fallthru
      _
    // Predicated region
    $region26: #{tpu_custom_call.1} parent=1 // pred_check
      _
    $region27: #{tpu_custom_call.1} parent=1 // pred_check_branch
      %196 = sbr.rel (0) target = $region29
    $region28: #{tpu_custom_call.1} parent=1 // pred_region
      %197 = dma.done [#allocation6], 512
    $region29: #{tpu_custom_call.1} parent=1 // pred_fallthru
      _
    // Predicated region
    $region30: #{tpu_custom_call.1} parent=1 // pred_check
      _
    $region31: #{tpu_custom_call.1} parent=1 // pred_check_branch
      %199 = sbr.rel (0) target = $region33
    $region32: #{tpu_custom_call.1} parent=1 // pred_region
      %200 = dma.done [#allocation9], 16
    $region33: #{tpu_custom_call.1} parent=1 // pred_fallthru
      _
    %201 = vsyncpa [#allocation5], 1
    %202 = vsyncpa [#allocation6], 1
    %203 = vsyncpa [#allocation9], 1

</llo_original>
